<compile_context>
chip_gen: v6e
topology: v6e:2x2x1
jax: 0.10.0
libtpu: 0.0.40
codegen_flags: <defaults>
</compile_context>

<pallas_src>
import functools

import jax
import jax.numpy as jnp
from jax import lax
from jax.experimental import pallas as pl
from jax.experimental.pallas import tpu as pltpu


def _round_up(x, m):
    return ((x + m - 1) // m) * m


def _supcon_kernel(anchor_ref, contrast_ref, lab_row_ref, lab_col_ref, out_ref,
                   *, inv_temperature, loss_scale, n_valid):
    """One anchor row-tile of the SupCon loss.

    anchor_ref   : [TM, D_pad]   bf16 -- anchor features for this tile
    contrast_ref : [N_pad, D_pad] bf16 -- full contrast matrix (VMEM resident)
    lab_row_ref  : [TM, 1]       i32  -- labels of the anchor tile (pad = -1)
    lab_col_ref  : [1, N_pad]    i32  -- labels of all contrasts (pad = -1)
    out_ref      : [TM, 1]       f32  -- per-anchor loss (0 for padded rows)
    """
    tm = anchor_ref.shape[0]
    n_pad = contrast_ref.shape[0]

    # 'NT' matmul on the MXU: [TM, D] x [N_pad, D]^T -> [TM, N_pad], f32 acc.
    logits = lax.dot_general(
        anchor_ref[...], contrast_ref[...],
        (((1,), (1,)), ((), ())),
        preferred_element_type=jnp.float32) * inv_temperature

    # Fold the self-contrast (diagonal) mask and the padded-column mask into the
    # logits.  The per-row max shift cancels exactly in log_prob, so masking
    # before the max is mathematically identical to the PyTorch reference.
    row0 = pl.program_id(0) * tm
    row_ids = row0 + lax.broadcasted_iota(jnp.int32, (tm, n_pad), 0)
    col_ids = lax.broadcasted_iota(jnp.int32, (tm, n_pad), 1)
    keep = (col_ids != row_ids) & (col_ids < n_valid)

    neg_big = jnp.float32(-1e30)
    masked_logits = jnp.where(keep, logits, neg_big)

    row_max = jnp.max(masked_logits, axis=1, keepdims=True)          # [TM, 1]
    shifted = masked_logits - row_max                                # [TM, N_pad]
    denom = jnp.sum(jnp.exp(shifted), axis=1, keepdims=True)         # excluded cols -> exp = 0
    log_denom = jnp.log(denom)                                       # [TM, 1]

    # Positive-pair mask: same label, off-diagonal, real (non-padded) column.
    pos = (lab_row_ref[...] == lab_col_ref[...]) & keep              # [TM, N_pad] bool
    pos_cnt = jnp.sum(pos.astype(jnp.float32), axis=1, keepdims=True)
    pos_logit_sum = jnp.sum(jnp.where(pos, shifted, 0.0), axis=1, keepdims=True)

    # sum(mask * log_prob) = sum(mask * shifted) - log_denom * pos_cnt
    mean_log_prob_pos = (pos_logit_sum - log_denom * pos_cnt) / jnp.maximum(pos_cnt, 1.0)
    has_pos = pos_cnt > 0.0
    # Anchors with no positive pair would be NaN in the PyTorch code; emit 0 instead.
    out_ref[...] = jnp.where(has_pos, loss_scale * mean_log_prob_pos, 0.0)


def supcon_loss_pallas(features, labels, *, temperature=0.07,
                       base_temperature=0.07, tm=None):
    """features: [bsz, n_views, D] f32; labels: [bsz] int.  Returns scalar loss."""
    bsz, n_views, d = features.shape
    n = bsz * n_views

    d_pad = _round_up(d, 128)                       # lane-dense, full-MXU contraction
    if tm is None:
        tm = 256 if n >= 256 else _round_up(n, 8)   # v7x-safe tile (TM x N_pad temporaries)
    tm = _round_up(min(tm, max(n, 8)), 8)
    n_pad = _round_up(n, tm)
    grid = n_pad // tm

    # contrast_feature = cat(unbind(features, dim=1), dim=0) -> row k = v*bsz + b
    contrast = jnp.transpose(features, (1, 0, 2)).reshape(n, d).astype(jnp.float32)
    feat = jnp.zeros((n_pad, d_pad), jnp.float32).at[:n, :d].set(contrast)
    feat_bf16 = feat.astype(jnp.bfloat16)           # bf16 MXU inputs, f32 accumulation

    labels_rep = jnp.tile(labels.astype(jnp.int32).reshape(-1), n_views)   # [n]
    labels_pad = jnp.full((n_pad,), -1, jnp.int32).at[:n].set(labels_rep)  # -1 sentinel
    lab_row = labels_pad.reshape(n_pad, 1)
    lab_col = labels_pad.reshape(1, n_pad)

    kernel = functools.partial(
        _supcon_kernel,
        inv_temperature=float(1.0 / temperature),
        loss_scale=float(-(temperature / base_temperature)),
        n_valid=n)

    cost = pl.CostEstimate(
        flops=2 * n_pad * n_pad * d_pad + 8 * n_pad * n_pad,
        transcendentals=n_pad * n_pad + 2 * n_pad,
        bytes_accessed=(grid + 1) * n_pad * d_pad * 2 + 2 * n_pad * 4 + n_pad * 4)

    per_anchor = pl.pallas_call(
        kernel,
        out_shape=jax.ShapeDtypeStruct((n_pad, 1), jnp.float32),
        grid_spec=pltpu.PrefetchScalarGridSpec(
            num_scalar_prefetch=0,
            grid=(grid,),
            in_specs=[
                pl.BlockSpec((tm, d_pad), lambda i: (i, 0)),     # anchor row tile
                pl.BlockSpec((n_pad, d_pad), lambda i: (0, 0)),  # full contrast (resident)
                pl.BlockSpec((tm, 1), lambda i: (i, 0)),         # anchor labels
                pl.BlockSpec((1, n_pad), lambda i: (0, 0)),      # all labels (resident)
            ],
            out_specs=pl.BlockSpec((tm, 1), lambda i: (i, 0)),   # per-anchor loss
        ),
        compiler_params=pltpu.CompilerParams(
            dimension_semantics=("parallel",),                   # megacore-shardable on v7x
            vmem_limit_bytes=32 * 1024 * 1024),
        cost_estimate=cost,
    )(feat_bf16, feat_bf16, lab_row, lab_col)

    return jnp.sum(per_anchor[:n, 0]) / jnp.float32(n)


def supcon_loss_ref(features, labels, temperature=0.07, base_temperature=0.07,
                    matmul_dtype=jnp.float32):
    """Pure-JAX reference mirroring the PyTorch forward (contrast_mode='all')."""
    bsz, n_views, d = features.shape
    n = bsz * n_views
    contrast = jnp.transpose(features, (1, 0, 2)).reshape(n, d)
    cm = contrast.astype(matmul_dtype)
    logits = jnp.dot(cm, cm.T, preferred_element_type=jnp.float32) / temperature
    logits = logits - jnp.max(logits, axis=1, keepdims=True)
    mask = (labels[:, None] == labels[None, :]).astype(jnp.float32)
    mask = jnp.tile(mask, (n_views, n_views))
    logits_mask = 1.0 - jnp.eye(n, dtype=jnp.float32)
    mask = mask * logits_mask
    exp_logits = jnp.exp(logits) * logits_mask
    log_prob = logits - jnp.log(jnp.sum(exp_logits, axis=1, keepdims=True))
    mean_log_prob_pos = jnp.sum(mask * log_prob, axis=1) / jnp.sum(mask, axis=1)
    loss = -(temperature / base_temperature) * mean_log_prob_pos
    return jnp.mean(loss)


if __name__ == "__main__":
    key = jax.random.PRNGKey(0)
    k_feat, k_lab = jax.random.split(key)

    bsz, n_views, feat_dim, n_classes = 8, 2, 32, 4

    feats = jax.random.normal(k_feat, (bsz, n_views, feat_dim), dtype=jnp.float32)
    # SupConLoss expects L2-normalized projection features
    feats = feats / jnp.linalg.norm(feats, axis=-1, keepdims=True)
    labels = jax.random.randint(k_lab, (bsz,), 0, n_classes, dtype=jnp.int32)

    loss = jax.block_until_ready(supcon_loss_pallas(feats, labels))

    # Tight check against a reference using the same bf16 matmul inputs
    # (validates the kernel math), loose check against the pure-f32 reference
    # (validates semantics; bf16 MXU inputs perturb the logits slightly).
    ref_bf16 = jax.block_until_ready(
        supcon_loss_ref(feats, labels, matmul_dtype=jnp.bfloat16))
    ref_f32 = jax.block_until_ready(supcon_loss_ref(feats, labels))
    assert jnp.allclose(loss, ref_bf16, rtol=2e-3, atol=2e-3), (loss, ref_bf16)
    assert jnp.allclose(loss, ref_f32, rtol=5e-2, atol=5e-2), (loss, ref_f32)

    # Exercise the multi-tile (grid > 1) path as well.
    loss_tiled = jax.block_until_ready(supcon_loss_pallas(feats, labels, tm=8))
    assert jnp.allclose(loss_tiled, ref_bf16, rtol=2e-3, atol=2e-3), (loss_tiled, ref_bf16)

    print("KERNEL_OK")
</pallas_src>

<mosaic_0001>
module attributes {stable_mosaic.version = 11 : i64} {
  func.func @_supcon_kernel(%arg0: i32, %arg1: memref<16x128xbf16, #tpu.memory_space<vmem>>, %arg2: memref<16x128xbf16, #tpu.memory_space<vmem>>, %arg3: memref<16x1xi32, #tpu.memory_space<vmem>>, %arg4: memref<1x16xi32, #tpu.memory_space<vmem>>, %arg5: memref<16x1xf32, #tpu.memory_space<vmem>>) attributes {dimension_semantics = [#tpu.dimension_semantics<parallel>], iteration_bounds = array<i64: 1>, scalar_prefetch = 0 : i64, scratch_operands = 0 : i64, tpu.core_type = #tpu.core_type<tc>, window_params = [{transform_indices = @transform_0, window_bounds = array<i64: 16, 128>}, {pipeline_mode = #tpu.pipeline_mode<synchronous>, transform_indices = @transform_1, window_bounds = array<i64: 16, 128>}, {transform_indices = @transform_2, window_bounds = array<i64: 16, 1>}, {pipeline_mode = #tpu.pipeline_mode<synchronous>, transform_indices = @transform_3, window_bounds = array<i64: 1, 16>}, {transform_indices = @transform_4, window_bounds = array<i64: 16, 1>}]} {
    %c0 = arith.constant 0 : index
    %c0_0 = arith.constant 0 : index
    %0 = vector.load %arg1[%c0, %c0_0] : memref<16x128xbf16, #tpu.memory_space<vmem>>, vector<16x128xbf16>
    %c0_1 = arith.constant 0 : index
    %c0_2 = arith.constant 0 : index
    %1 = vector.load %arg2[%c0_1, %c0_2] : memref<16x128xbf16, #tpu.memory_space<vmem>>, vector<16x128xbf16>
    %cst = arith.constant dense<0.000000e+00> : vector<16x16xf32>
    %2 = tpu.matmul %0, %1, %cst {dimension_numbers = #tpu.dot_dimension_numbers<[1], [1], [0], [0], [0, 0, 1, 0], [], []>} : vector<16x128xbf16>, vector<16x128xbf16>, vector<16x16xf32> -> vector<16x16xf32>
    %cst_3 = arith.constant 14.2857141 : f32
    %3 = vector.broadcast %cst_3 : f32 to vector<16x16xf32>
    %4 = arith.mulf %2, %3 : vector<16x16xf32>
    %c16_i32 = arith.constant 16 : i32
    %5 = arith.muli %arg0, %c16_i32 : i32
    %6 = tpu.iota {dimensions = array<i32: 0>} : vector<16x16xi32>
    %7 = vector.broadcast %5 : i32 to vector<16x16xi32>
    %8 = arith.addi %7, %6 : vector<16x16xi32>
    %9 = tpu.iota {dimensions = array<i32: 1>} : vector<16x16xi32>
    %10 = arith.cmpi ne, %9, %8 : vector<16x16xi32>
    %c16_i32_4 = arith.constant 16 : i32
    %11 = vector.broadcast %c16_i32_4 : i32 to vector<16x16xi32>
    %12 = arith.cmpi slt, %9, %11 : vector<16x16xi32>
    %13 = arith.andi %10, %12 : vector<16x16xi1>
    %cst_5 = arith.constant -1.000000e+30 : f32
    %14 = vector.broadcast %cst_5 : f32 to vector<16x16xf32>
    %15 = arith.select %13, %4, %14 : vector<16x16xi1>, vector<16x16xf32>
    %cst_6 = arith.constant dense<0xFF800000> : vector<16xf32>
    %16 = vector.multi_reduction <maximumf>, %15, %cst_6 [1] : vector<16x16xf32> to vector<16xf32>
    %17 = vector.shape_cast %16 : vector<16xf32> to vector<16x1xf32>
    %18 = vector.broadcast %17 : vector<16x1xf32> to vector<16x16xf32>
    %19 = arith.subf %15, %18 : vector<16x16xf32>
    %20 = math.exp %19 : vector<16x16xf32>
    %cst_7 = arith.constant dense<0.000000e+00> : vector<16xf32>
    %21 = vector.multi_reduction <add>, %20, %cst_7 [1] : vector<16x16xf32> to vector<16xf32>
    %22 = vector.shape_cast %21 : vector<16xf32> to vector<16x1xf32>
    %23 = math.log %22 : vector<16x1xf32>
    %c0_8 = arith.constant 0 : index
    %c0_9 = arith.constant 0 : index
    %24 = vector.load %arg3[%c0_8, %c0_9] : memref<16x1xi32, #tpu.memory_space<vmem>>, vector<16x1xi32>
    %c0_10 = arith.constant 0 : index
    %c0_11 = arith.constant 0 : index
    %25 = vector.load %arg4[%c0_10, %c0_11] : memref<1x16xi32, #tpu.memory_space<vmem>>, vector<1x16xi32>
    %26 = vector.broadcast %24 : vector<16x1xi32> to vector<16x16xi32>
    %27 = vector.broadcast %25 : vector<1x16xi32> to vector<16x16xi32>
    %28 = arith.cmpi eq, %26, %27 : vector<16x16xi32>
    %29 = arith.andi %28, %13 : vector<16x16xi1>
    %30 = arith.extui %29 : vector<16x16xi1> to vector<16x16xi32>
    %31 = arith.sitofp %30 : vector<16x16xi32> to vector<16x16xf32>
    %cst_12 = arith.constant dense<0.000000e+00> : vector<16xf32>
    %32 = vector.multi_reduction <add>, %31, %cst_12 [1] : vector<16x16xf32> to vector<16xf32>
    %33 = vector.shape_cast %32 : vector<16xf32> to vector<16x1xf32>
    %cst_13 = arith.constant 0.000000e+00 : f32
    %34 = vector.broadcast %cst_13 : f32 to vector<16x16xf32>
    %35 = arith.select %29, %19, %34 : vector<16x16xi1>, vector<16x16xf32>
    %cst_14 = arith.constant dense<0.000000e+00> : vector<16xf32>
    %36 = vector.multi_reduction <add>, %35, %cst_14 [1] : vector<16x16xf32> to vector<16xf32>
    %37 = vector.shape_cast %36 : vector<16xf32> to vector<16x1xf32>
    %38 = arith.mulf %23, %33 : vector<16x1xf32>
    %39 = arith.subf %37, %38 : vector<16x1xf32>
    %cst_15 = arith.constant 1.000000e+00 : f32
    %40 = vector.broadcast %cst_15 : f32 to vector<16x1xf32>
    %41 = arith.maximumf %33, %40 : vector<16x1xf32>
    %42 = arith.divf %39, %41 : vector<16x1xf32>
    %cst_16 = arith.constant 0.000000e+00 : f32
    %43 = vector.broadcast %cst_16 : f32 to vector<16x1xf32>
    %44 = arith.cmpf ogt, %33, %43 : vector<16x1xf32>
    %cst_17 = arith.constant -1.000000e+00 : f32
    %45 = vector.broadcast %cst_17 : f32 to vector<16x1xf32>
    %46 = arith.mulf %45, %42 : vector<16x1xf32>
    %cst_18 = arith.constant 0.000000e+00 : f32
    %47 = vector.broadcast %cst_18 : f32 to vector<16x1xf32>
    %48 = arith.select %44, %46, %47 : vector<16x1xi1>, vector<16x1xf32>
    %c0_19 = arith.constant 0 : index
    %c0_20 = arith.constant 0 : index
    %49 = vector.load %arg5[%c0_19, %c0_20] : memref<16x1xf32, #tpu.memory_space<vmem>>, vector<16x1xf32>
    tpu.vector_store %arg5[%c0_19, %c0_20], %48 {strides = array<i32>} : memref<16x1xf32, #tpu.memory_space<vmem>>, vector<16x1xf32>,
    return
  }
  func.func @transform_0(%arg0: i32) -> (i32, i32) {
    %c0_i32 = arith.constant 0 : i32
    %c0_i32_0 = arith.constant 0 : i32
    return %arg0, %c0_i32 : i32, i32
  }
  func.func @transform_1(%arg0: i32) -> (i32, i32) {
    %c0_i32 = arith.constant 0 : i32
    %c0_i32_0 = arith.constant 0 : i32
    %c0_i32_1 = arith.constant 0 : i32
    return %c0_i32, %c0_i32_0 : i32, i32
  }
  func.func @transform_2(%arg0: i32) -> (i32, i32) {
    %c0_i32 = arith.constant 0 : i32
    %c0_i32_0 = arith.constant 0 : i32
    return %arg0, %c0_i32 : i32, i32
  }
  func.func @transform_3(%arg0: i32) -> (i32, i32) {
    %c0_i32 = arith.constant 0 : i32
    %c0_i32_0 = arith.constant 0 : i32
    %c0_i32_1 = arith.constant 0 : i32
    return %c0_i32, %c0_i32_0 : i32, i32
  }
  func.func @transform_4(%arg0: i32) -> (i32, i32) {
    %c0_i32 = arith.constant 0 : i32
    %c0_i32_0 = arith.constant 0 : i32
    return %arg0, %c0_i32 : i32, i32
  }
}

</mosaic_0001>

<llo_original>
// kernel: tpu_custom_call.1
$region0: #{tpu_custom_call.1}
  #allocation0 [shape = 'u32[]', space=smem, size = 0x4, offset = 0x4, fixed_abs, tag = 'smem constant byte address 0x4 - core index']
  #allocation1 [shape = 'u32[144,128]{1,0:T(1,128)}', space=vmem, size = 0x12000, scoped, tag = 'internal scratch']
  %s0 = inlined_call_operand.vmem [shape: bf16[16,128], index: 0, kind: input, shape index: {}]
  %s1 = inlined_call_operand.vmem [shape: bf16[16,128], index: 1, kind: input, shape index: {}]
  %s2 = inlined_call_operand.vmem [shape: s32[16,1], index: 2, kind: input, shape index: {}]
  %s3 = inlined_call_operand.vmem [shape: s32[1,16], index: 3, kind: input, shape index: {}]
  %s4 = inlined_call_operand.vmem [shape: f32[16,1], index: 4, kind: output, shape index: {}]
  %s5 = sld [smem:[#allocation0]]
  $region26: #{tpu_custom_call.1} parent=0
    _
  %s7 = ssub.s32 1, %s5
  %s8 = scalar_select 0, %s7, %s5
  // Predicated region
  $region2: #{tpu_custom_call.1} parent=0 // pred_check
    _
  $region3: #{tpu_custom_call.1} parent=0 // pred_check_branch
    %10 = sbr.rel (0) target = $region5
  $region4: #{tpu_custom_call.1} parent=0 // pred_region
    _
  $region5: #{tpu_custom_call.1} parent=0 // pred_fallthru
    _
  // Predicated region
  $region6: #{tpu_custom_call.1} parent=0 // pred_check
    _
  $region7: #{tpu_custom_call.1} parent=0 // pred_check_branch
    %12 = sbr.rel (0) target = $region9
  $region8: #{tpu_custom_call.1} parent=0 // pred_region
    _
  $region9: #{tpu_custom_call.1} parent=0 // pred_fallthru
    _
  // Predicated region
  $region10: #{tpu_custom_call.1} parent=0 // pred_check
    _
  $region11: #{tpu_custom_call.1} parent=0 // pred_check_branch
    %14 = sbr.rel (0) target = $region13
  $region12: #{tpu_custom_call.1} parent=0 // pred_region
    _
  $region13: #{tpu_custom_call.1} parent=0 // pred_fallthru
    _
  // Predicated region
  $region14: #{tpu_custom_call.1} parent=0 // pred_check
    _
  $region15: #{tpu_custom_call.1} parent=0 // pred_check_branch
    %16 = sbr.rel (0) target = $region17
  $region16: #{tpu_custom_call.1} parent=0 // pred_region
    _
  $region17: #{tpu_custom_call.1} parent=0 // pred_fallthru
    _
  %v18 = vld [vmem:[%s0] sm:$0xf]
  %v19 = vld [vmem:[%s0 + $0x4] sm:$0xf]
  %v20 = vld [vmem:[%s1] sm:$0xf]
  %v21 = vld [vmem:[%s1 + $0x4] sm:$0xf]
  %v24 = vunpack.c.l.b16 %v18
  %v25 = vunpack.c.l.b16 %v19
  %v26 = vpack.c.b16 %v25, %v24
  %v30 = vunpack.c.l.b16 %v20
  %v31 = vunpack.c.l.b16 %v21
  %v32 = vpack.c.b16 %v31, %v30
  %34 = vmatprep.subr.bf16.mxu0 0
  %35 = vmatpush1.bf16.xpose.msra.mxu0 0
  %36 = vmatprep.subr.bf16.mxu0 0
  %37 = vmatpush1.bf16.xpose.msra.mxu0 0
  %38 = vmatprep.subr.bf16.mxu0 0
  %39 = vmatpush1.bf16.xpose.msra.mxu0 0
  %40 = vmatprep.subr.bf16.mxu0 0
  %41 = vmatpush1.bf16.xpose.msra.mxu0 0
  %42 = vmatprep.subr.bf16.mxu0 0
  %43 = vmatpush1.bf16.xpose.msra.mxu0 0
  %44 = vmatprep.subr.bf16.mxu0 0
  %45 = vmatpush1.bf16.xpose.msra.mxu0 0
  %46 = vmatprep.subr.bf16.mxu0 0
  %47 = vmatpush1.bf16.xpose.msra.mxu0 0
  %48 = vmatprep.subr.bf16.mxu0 0
  %49 = vmatpush1.bf16.xpose.msra.mxu0 %v32
  %50 = vmatprep.subr.bf16.mxu0 0
  %51 = vmatpush2.bf16.xpose.msra.mxu0 0
  %52 = vmatprep.subr.bf16.mxu0 0
  %53 = vmatpush2.bf16.xpose.msra.mxu0 0
  %54 = vmatprep.subr.bf16.mxu0 0
  %55 = vmatpush2.bf16.xpose.msra.mxu0 0
  %56 = vmatprep.subr.bf16.mxu0 0
  %57 = vmatpush2.bf16.xpose.msra.mxu0 0
  %58 = vmatprep.subr.bf16.mxu0 0
  %59 = vmatpush2.bf16.xpose.msra.mxu0 0
  %60 = vmatprep.subr.bf16.mxu0 0
  %61 = vmatpush2.bf16.xpose.msra.mxu0 0
  %62 = vmatprep.subr.bf16.mxu0 0
  %63 = vmatpush2.bf16.xpose.msra.mxu0 0
  %64 = vmatprep.subr.bf16.mxu0 0
  %65 = vmatpush2.bf16.xpose.msra.mxu0 0
  %66 = vmatprep.mubr.bf16.mxu0 0
  %67 = vmatmul.mubr.bf16.gmra.mxu0 %v26
  %v68 = vpop.f32.mrf.mxu0
  %v69 = vadd.f32 0.0, %v68
  %v70 = vpop.f32.mrf.mxu0
  %v71 = vpop.f32.mrf.mxu0
  %v72 = vadd.f32 0.0, %v71
  %v73 = vpop.f32.mrf.mxu0
  %74 = vdwg.mxu0
  %v75 = vmul.f32 %v69, 14.285714
  %v76 = vmul.f32 %v72, 14.285714
  %s77 = smul.u32 0, 16
  %v78 = vlaneseq
  %v79 = vshrl.u32 %v78, 7
  %v80 = vadd.s32 %v79, 8
  %v81 = vstv %s77
  %v82 = vadd.s32 %v81, %v79
  %v83 = vadd.s32 %v81, %v80
  %v84 = vlaneseq
  %v85 = vand.u32 %v84, 127
  %vm86 = vcmp.ne.s32.totalorder %v85, %v82
  %vm87 = vcmp.ne.s32.totalorder %v85, %v83
  %vm88 = vcmp.lt.s32.totalorder %v85, 16
  %vm89 = vmand %vm86, %vm88
  %vm90 = vmand %vm87, %vm88
  %v91 = vsel %vm89, %v75, -1e+30
  %v92 = vsel %vm90, %v76, -1e+30
  %vm93 = vcmask 130048
  %v94 = vsel %vm93, %v91, -inf
  %95 = vmax.xlane.f32.xlu0 %v94
  %v96 = vpop.xlane.xlu0 %95
  %v97 = vsel %vm93, %v92, -inf
  %98 = vmax.xlane.f32.xlu0 %v97
  %v99 = vpop.xlane.xlu0 %98
  %v100 = vsub.f32 %v91, %v96
  %v101 = vsub.f32 %v92, %v99
  %v102 = vmul.f32 %v100, 1.442695
  %v103 = vpow.pop %v102
  %v104 = vmul.f32 %v101, 1.442695
  %v105 = vpow.pop %v104
  %v106 = vsel %vm93, %v103, 0.0
  %107 = vadd.xlane.f32.xlu0 %v106
  %v108 = vpop.xlane.xlu0 %107
  %v109 = vsel %vm93, %v105, 0.0
  %110 = vadd.xlane.f32.xlu0 %v109
  %v111 = vpop.xlane.xlu0 %110
  %v112 = vlog2.pop %v108
  %v113 = vmul.f32 %v112, 0.6931472
  %v114 = vlog2.pop %v111
  %v115 = vmul.f32 %v114, 0.6931472
  %v116 = vld [vmem:[%s2] sm:$0xff]
  %v117 = vld [vmem:[%s2 + $0x8] sm:$0xff]
  %v118 = vld [vmem:[%s3] sm:$0x1]
  %119 = vset.pattern.permute.xlu0 0
  %120 = vperm.xlu0 %119, %v116
  %v121 = vpop.permute.xlu0 %120
  %122 = vset.pattern.permute.xlu0 0
  %123 = vperm.xlu0 %122, %v117
  %v124 = vpop.permute.xlu0 %123
  %v125 = vlaneseq
  %v126 = vshrl.u32 %v125, 7
  %v127 = vsub.s32 0, %v126
  %v128 = vrot.slane %v118, %v127
  %vm129 = vcmp.eq.s32.totalorder %v121, %v128
  %vm130 = vcmp.eq.s32.totalorder %v124, %v128
  %vm131 = vmand %vm129, %vm89
  %vm132 = vmand %vm130, %vm90
  %v133 = vsel %vm131, 1, 0
  %v134 = vsel %vm132, 1, 0
  %v135 = vcvt.s32.f32 %v133
  %v136 = vcvt.s32.f32 %v134
  %v137 = vsel %vm93, %v135, 0.0
  %138 = vadd.xlane.f32.xlu0 %v137
  %v139 = vpop.xlane.xlu0 %138
  %v140 = vsel %vm93, %v136, 0.0
  %141 = vadd.xlane.f32.xlu0 %v140
  %v142 = vpop.xlane.xlu0 %141
  %v143 = vsel %vm131, %v100, 0.0
  %v144 = vsel %vm132, %v101, 0.0
  %v145 = vsel %vm93, %v143, 0.0
  %146 = vadd.xlane.f32.xlu0 %v145
  %v147 = vpop.xlane.xlu0 %146
  %v148 = vsel %vm93, %v144, 0.0
  %149 = vadd.xlane.f32.xlu0 %v148
  %v150 = vpop.xlane.xlu0 %149
  %v151 = vmul.f32 %v113, %v139
  %v152 = vmul.f32 %v115, %v142
  %v153 = vsub.f32 %v147, %v151
  %v154 = vsub.f32 %v150, %v152
  %v155 = vmax.f32 %v139, 1.0
  %v156 = vmax.f32 %v142, 1.0
  %v157 = vrcp.pop %v155
  %v158 = vmul.f32 %v153, %v157
  %v159 = vrcp.pop %v156
  %v160 = vmul.f32 %v154, %v159
  %vm161 = vcmp.gt.f32.partialorder %v139, 0.0
  %vm162 = vcmp.gt.f32.partialorder %v142, 0.0
  %v163 = vmul.f32 %v158, -1.0
  %v164 = vmul.f32 %v160, -1.0
  %v165 = vsel %vm161, %v163, 0.0
  %v166 = vsel %vm162, %v164, 0.0
  %vm167 = vcmask 7168
  %168 = vst.msk [vmem:[%s4] sm:$0xff] %vm167, %v165
  %169 = vst.msk [vmem:[%s4 + $0x8] sm:$0xff] %vm167, %v166
  // Predicated region
  $region18: #{tpu_custom_call.1} parent=0 // pred_check
    _
  $region19: #{tpu_custom_call.1} parent=0 // pred_check_branch
    %171 = sbr.rel (0) target = $region21
  $region20: #{tpu_custom_call.1} parent=0 // pred_region
    _
  $region21: #{tpu_custom_call.1} parent=0 // pred_fallthru
    _
  // Predicated region
  $region22: #{tpu_custom_call.1} parent=0 // pred_check
    _
  $region23: #{tpu_custom_call.1} parent=0 // pred_check_branch
    %173 = sbr.rel (0) target = $region25
  $region24: #{tpu_custom_call.1} parent=0 // pred_region
    _
  $region25: #{tpu_custom_call.1} parent=0 // pred_fallthru
    _

</llo_original>
